<compile_context>
chip_gen: v5e
topology: v5e:2x2
jax: 0.10.0
libtpu: 0.0.40
codegen_flags: <defaults>
</compile_context>

<pallas_src>
import functools

import jax
import jax.numpy as jnp
from jax.experimental import pallas as pl
from jax.experimental.pallas import tpu as pltpu


def _round_up(n, m):
    return ((n + m - 1) // m) * m


def introspection_kernel(
    x_ref,                                   # (tile_b, D) f32 activations
    w1h_ref, b1_ref,                         # fused [w1 | Wh1x] (D, 3H), b1 (1, H)
    w2_ref, b2_ref,                          # (H, H), (1, H)
    w3p_ref, b3p_ref,                        # w3/b3 zero-padded to OUT_W lanes
    w3a_ref, bh1_ref,                        # refolded head path: w3@Wh1a (H, 2H), folded bias (1, 2H)
    wh2_ref, bh2_ref,                        # head layer-2, block-diag, padded to OUT_W (cols D, D+1)
    out_ref,                                 # (tile_b, OUT_W) merged lane-dense output slab
    *, hidden_dim, conf_lane,
):
    cdt = w1h_ref.dtype                      # compute dtype (bf16 default), f32 accumulation
    H = hidden_dim
    x = x_ref[...].astype(cdt)               # in-kernel cast; hidden under the matmuls

    # One fused K=D matmul for both consumers of x:  x @ [w1 | Wh1x] -> (tile_b, 3H)
    t = jnp.dot(x, w1h_ref[...], preferred_element_type=jnp.float32)
    h1 = jnp.maximum(t[:, :H] + b1_ref[...], 0.0).astype(cdt)
    x_head = t[:, H:]                        # f32 (tile_b, 2H); slice at lane 256 is free

    h2 = jnp.maximum(
        jnp.dot(h1, w2_ref[...], preferred_element_type=jnp.float32) + b2_ref[...], 0.0
    ).astype(cdt)

    # analysis, already as a lane-dense (tile_b, OUT_W) slab (zeros beyond lane D)
    slab = jnp.dot(h2, w3p_ref[...], preferred_element_type=jnp.float32) + b3p_ref[...]

    # fused heads (conf || err), with the analysis dependency refolded:
    #   relu( x @ Wh1x + h2 @ (w3 @ Wh1a) + (bh1 + b3 @ Wh1a) )
    hh = jnp.maximum(
        x_head + jnp.dot(h2, w3a_ref[...], preferred_element_type=jnp.float32) + bh1_ref[...],
        0.0,
    ).astype(cdt)
    ce = jnp.dot(hh, wh2_ref[...], preferred_element_type=jnp.float32) + bh2_ref[...]

    lane = jax.lax.broadcasted_iota(jnp.int32, slab.shape, 1)
    is_head = (lane == conf_lane) | (lane == conf_lane + 1)
    slab = slab + jnp.where(is_head, jax.nn.sigmoid(ce), 0.0)

    out_ref[...] = slab.astype(out_ref.dtype)   # ONE unmasked, lane-dense store


def init_params(key, input_dim, hidden_dim, dtype=jnp.float32):
    """Deterministic Linear init (uniform +-1/sqrt(fan_in)), weights stored (in, out)."""
    def linear(k, fan_in, fan_out):
        kw, kb = jax.random.split(k)
        bound = 1.0 / jnp.sqrt(jnp.asarray(fan_in, jnp.float32))
        w = jax.random.uniform(kw, (fan_in, fan_out), dtype, -bound, bound)
        b = jax.random.uniform(kb, (1, fan_out), dtype, -bound, bound)
        return w, b

    ks = jax.random.split(key, 7)
    D, H = input_dim, hidden_dim
    w1, b1 = linear(ks[0], D, H)
    w2, b2 = linear(ks[1], H, H)
    w3, b3 = linear(ks[2], H, D)
    wc1, bc1 = linear(ks[3], 2 * D, H)
    wc2, bc2 = linear(ks[4], H, 1)
    we1, be1 = linear(ks[5], 2 * D, H)
    we2, be2 = linear(ks[6], H, 1)
    return dict(
        w1=w1, b1=b1, w2=w2, b2=b2, w3=w3, b3=b3,
        wc1x=wc1[:D], wc1a=wc1[D:], bc1=bc1, wc2=wc2, bc2=bc2,
        we1x=we1[:D], we1a=we1[D:], be1=be1, we2=we2, be2=be2,
    )


@functools.partial(jax.jit, static_argnames=("tile_b", "compute_dtype"))
def introspection_forward(x, params, *, tile_b=None, compute_dtype=jnp.bfloat16):
    B, D = x.shape
    H = params["w1"].shape[1]
    out_dtype = x.dtype
    cdt = jnp.dtype(compute_dtype)
    f32 = jnp.float32

    # --- generation-aware tiling: v7x has 64 MiB VMEM + 2 TCs; v5e/v6e have 128 MiB ---
    try:
        vmem_cap = int(getattr(pltpu.get_tpu_info(), "vmem_capacity_bytes",
                               128 * 1024 * 1024))
    except Exception:
        vmem_cap = 128 * 1024 * 1024
    small_vmem = vmem_cap <= 64 * 1024 * 1024
    if tile_b is None:
        tile_b = 1024 if small_vmem else 2048
    vmem_limit = (48 if small_vmem else 64) * 1024 * 1024

    sub = 8                                       # f32 sublane granularity for x / out tiles
    B_sub = _round_up(B, sub)
    tile_b = max(sub, (min(tile_b, B_sub) // sub) * sub)
    if B_sub >= 2 * sub and tile_b >= B_sub:
        tile_b = _round_up((B_sub + 1) // 2, sub)  # >=2 grid steps -> keep both v7x TCs busy
    B_pad = _round_up(B, tile_b)
    if B_pad != B:
        # Only when the grid doesn't divide B; padded rows are garbage and sliced off.
        x = jnp.pad(x, ((0, B_pad - B), (0, 0)))

    OUT_W = _round_up(D + 2, 128)                 # analysis in [0,D), conf @ D, err @ D+1

    p = params
    wh1x = jnp.concatenate([p["wc1x"], p["we1x"]], axis=1).astype(f32)     # (D, 2H)
    wh1a = jnp.concatenate([p["wc1a"], p["we1a"]], axis=1).astype(f32)     # (D, 2H)
    bh1 = jnp.concatenate([p["bc1"], p["be1"]], axis=1).astype(f32)        # (1, 2H)

    w1h = jnp.concatenate([p["w1"].astype(f32), wh1x], axis=1).astype(cdt)  # (D, 3H)
    b1 = p["b1"].astype(f32)
    w2 = p["w2"].astype(cdt)
    b2 = p["b2"].astype(f32)

    # analysis slab weights: zero-pad w3/b3 to OUT_W lanes
    w3p = jnp.zeros((H, OUT_W), f32).at[:, :D].set(p["w3"].astype(f32)).astype(cdt)
    b3p = jnp.zeros((1, OUT_W), f32).at[:, :D].set(p["b3"].astype(f32))

    # refold (in f32): analysis @ Wh1a == h2 @ (w3 @ Wh1a) + b3 @ Wh1a
    w3a = (p["w3"].astype(f32) @ wh1a).astype(cdt)                          # (H, 2H)
    bh1f = bh1 + p["b3"].astype(f32) @ wh1a                                 # (1, 2H)

    # head layer-2: block-diagonal, padded to OUT_W with conf at lane D, err at lane D+1
    wh2 = jnp.zeros((2 * H, OUT_W), f32)
    wh2 = wh2.at[:H, D].set(p["wc2"][:, 0].astype(f32))
    wh2 = wh2.at[H:, D + 1].set(p["we2"][:, 0].astype(f32)).astype(cdt)
    bh2 = jnp.zeros((1, OUT_W), f32)
    bh2 = bh2.at[0, D].set(p["bc2"][0, 0].astype(f32))
    bh2 = bh2.at[0, D + 1].set(p["be2"][0, 0].astype(f32))

    grid = (B_pad // tile_b,)

    def bcast(shape):   # whole-array block, constant across the batch grid (no re-DMA)
        return pl.BlockSpec(shape, lambda i: (0, 0))

    in_specs = [
        pl.BlockSpec((tile_b, D), lambda i: (i, 0)),       # x tile (f32; cast in-kernel)
        bcast((D, 3 * H)), bcast((1, H)),                  # w1h, b1
        bcast((H, H)), bcast((1, H)),                      # w2, b2
        bcast((H, OUT_W)), bcast((1, OUT_W)),              # w3p, b3p
        bcast((H, 2 * H)), bcast((1, 2 * H)),              # w3a, bh1f
        bcast((2 * H, OUT_W)), bcast((1, OUT_W)),          # wh2, bh2
    ]
    out_specs = pl.BlockSpec((tile_b, OUT_W), lambda i: (i, 0))

    merged = pl.pallas_call(
        functools.partial(introspection_kernel, hidden_dim=H, conf_lane=D),
        grid_spec=pltpu.PrefetchScalarGridSpec(
            num_scalar_prefetch=0,
            grid=grid,
            in_specs=in_specs,
            out_specs=out_specs,
        ),
        out_shape=jax.ShapeDtypeStruct((B_pad, OUT_W), out_dtype),
        compiler_params=pltpu.CompilerParams(
            dimension_semantics=("parallel",),             # shard batch tiles across TCs
            vmem_limit_bytes=vmem_limit,
        ),
    )(x, w1h, b1, w2, b2, w3p, b3p, w3a, bh1f, wh2, bh2)

    analysis = merged[:B, :D]
    conf = merged[:B, D:D + 1]
    err = merged[:B, D + 1:D + 2]
    return analysis, conf, err


def introspection_reference(x, p):
    """Pure-JAX f32 reference mirroring the PyTorch forward."""
    h = jnp.maximum(x @ p["w1"] + p["b1"], 0.0)
    h = jnp.maximum(h @ p["w2"] + p["b2"], 0.0)
    analysis = h @ p["w3"] + p["b3"]
    combined = jnp.concatenate([x, analysis], axis=-1)
    wc1 = jnp.concatenate([p["wc1x"], p["wc1a"]], axis=0)
    we1 = jnp.concatenate([p["we1x"], p["we1a"]], axis=0)
    hc = jnp.maximum(combined @ wc1 + p["bc1"], 0.0)
    conf = jax.nn.sigmoid(hc @ p["wc2"] + p["bc2"])
    he = jnp.maximum(combined @ we1 + p["be1"], 0.0)
    err = jax.nn.sigmoid(he @ p["we2"] + p["be2"])
    return analysis, conf, err


if __name__ == "__main__":
    INPUT_DIM = 32
    HIDDEN_DIM = 256
    BATCH = 2

    key = jax.random.PRNGKey(0)
    kx, kp = jax.random.split(key)
    x = jax.random.normal(kx, (BATCH, INPUT_DIM), jnp.float32)
    params = init_params(kp, INPUT_DIM, HIDDEN_DIM)

    ref_a, ref_c, ref_e = introspection_reference(x, params)

    # default fast path: bf16 operands, f32 accumulation
    analysis, conf, err = introspection_forward(x, params)
    jax.block_until_ready((analysis, conf, err))
    assert analysis.shape == (BATCH, INPUT_DIM)
    assert conf.shape == (BATCH, 1) and err.shape == (BATCH, 1)
    assert jnp.allclose(analysis, ref_a, atol=3e-2, rtol=3e-2)
    assert jnp.allclose(conf, ref_c, atol=3e-2, rtol=3e-2)
    assert jnp.allclose(err, ref_e, atol=3e-2, rtol=3e-2)

    # full-precision verification path (slightly looser tol: weight refold changes rounding)
    a32, c32, e32 = introspection_forward(x, params, compute_dtype=jnp.float32)
    jax.block_until_ready((a32, c32, e32))
    assert jnp.allclose(a32, ref_a, atol=5e-4, rtol=5e-4)
    assert jnp.allclose(c32, ref_c, atol=5e-4, rtol=5e-4)
    assert jnp.allclose(e32, ref_e, atol=5e-4, rtol=5e-4)

    print("KERNEL_OK")
</pallas_src>

<mosaic_0001>
module attributes {stable_mosaic.version = 11 : i64} {
  func.func @introspection_kernel(%arg0: i32, %arg1: memref<8x32xf32, #tpu.memory_space<vmem>>, %arg2: memref<32x768xbf16, #tpu.memory_space<vmem>>, %arg3: memref<1x256xf32, #tpu.memory_space<vmem>>, %arg4: memref<256x256xbf16, #tpu.memory_space<vmem>>, %arg5: memref<1x256xf32, #tpu.memory_space<vmem>>, %arg6: memref<256x128xbf16, #tpu.memory_space<vmem>>, %arg7: memref<1x128xf32, #tpu.memory_space<vmem>>, %arg8: memref<256x512xbf16, #tpu.memory_space<vmem>>, %arg9: memref<1x512xf32, #tpu.memory_space<vmem>>, %arg10: memref<512x128xbf16, #tpu.memory_space<vmem>>, %arg11: memref<1x128xf32, #tpu.memory_space<vmem>>, %arg12: memref<8x128xf32, #tpu.memory_space<vmem>>) attributes {dimension_semantics = [#tpu.dimension_semantics<parallel>], iteration_bounds = array<i64: 1>, scalar_prefetch = 0 : i64, scratch_operands = 0 : i64, tpu.core_type = #tpu.core_type<tc>, window_params = [{transform_indices = @transform_0, window_bounds = array<i64: 8, 32>}, {pipeline_mode = #tpu.pipeline_mode<synchronous>, transform_indices = @transform_1, window_bounds = array<i64: 32, 768>}, {pipeline_mode = #tpu.pipeline_mode<synchronous>, transform_indices = @transform_2, window_bounds = array<i64: 1, 256>}, {pipeline_mode = #tpu.pipeline_mode<synchronous>, transform_indices = @transform_3, window_bounds = array<i64: 256, 256>}, {pipeline_mode = #tpu.pipeline_mode<synchronous>, transform_indices = @transform_4, window_bounds = array<i64: 1, 256>}, {pipeline_mode = #tpu.pipeline_mode<synchronous>, transform_indices = @transform_5, window_bounds = array<i64: 256, 128>}, {pipeline_mode = #tpu.pipeline_mode<synchronous>, transform_indices = @transform_6, window_bounds = array<i64: 1, 128>}, {pipeline_mode = #tpu.pipeline_mode<synchronous>, transform_indices = @transform_7, window_bounds = array<i64: 256, 512>}, {pipeline_mode = #tpu.pipeline_mode<synchronous>, transform_indices = @transform_8, window_bounds = array<i64: 1, 512>}, {pipeline_mode = #tpu.pipeline_mode<synchronous>, transform_indices = @transform_9, window_bounds = array<i64: 512, 128>}, {pipeline_mode = #tpu.pipeline_mode<synchronous>, transform_indices = @transform_10, window_bounds = array<i64: 1, 128>}, {transform_indices = @transform_11, window_bounds = array<i64: 8, 128>}]} {
    %c0 = arith.constant 0 : index
    %c0_0 = arith.constant 0 : index
    %0 = vector.load %arg1[%c0, %c0_0] : memref<8x32xf32, #tpu.memory_space<vmem>>, vector<8x32xf32>
    %1 = arith.truncf %0 : vector<8x32xf32> to vector<8x32xbf16>
    %c0_1 = arith.constant 0 : index
    %c0_2 = arith.constant 0 : index
    %2 = vector.load %arg2[%c0_1, %c0_2] : memref<32x768xbf16, #tpu.memory_space<vmem>>, vector<32x768xbf16>
    %cst = arith.constant dense<0.000000e+00> : vector<8x768xf32>
    %3 = tpu.matmul %1, %2, %cst {dimension_numbers = #tpu.dot_dimension_numbers<[1], [0], [0], [1], [0, 0, 1, 1], [], []>} : vector<8x32xbf16>, vector<32x768xbf16>, vector<8x768xf32> -> vector<8x768xf32>
    %4 = vector.extract_strided_slice %3 {offsets = [0, 0], sizes = [8, 256], strides = [1, 1]} : vector<8x768xf32> to vector<8x256xf32>
    %c0_3 = arith.constant 0 : index
    %c0_4 = arith.constant 0 : index
    %5 = vector.load %arg3[%c0_3, %c0_4] : memref<1x256xf32, #tpu.memory_space<vmem>>, vector<1x256xf32>
    %6 = vector.broadcast %5 : vector<1x256xf32> to vector<8x256xf32>
    %7 = arith.addf %4, %6 : vector<8x256xf32>
    %cst_5 = arith.constant 0.000000e+00 : f32
    %8 = vector.broadcast %cst_5 : f32 to vector<8x256xf32>
    %9 = arith.maximumf %7, %8 : vector<8x256xf32>
    %10 = arith.truncf %9 : vector<8x256xf32> to vector<8x256xbf16>
    %11 = vector.extract_strided_slice %3 {offsets = [0, 256], sizes = [8, 512], strides = [1, 1]} : vector<8x768xf32> to vector<8x512xf32>
    %c0_6 = arith.constant 0 : index
    %c0_7 = arith.constant 0 : index
    %12 = vector.load %arg4[%c0_6, %c0_7] : memref<256x256xbf16, #tpu.memory_space<vmem>>, vector<256x256xbf16>
    %cst_8 = arith.constant dense<0.000000e+00> : vector<8x256xf32>
    %13 = tpu.matmul %10, %12, %cst_8 {dimension_numbers = #tpu.dot_dimension_numbers<[1], [0], [0], [1], [0, 0, 1, 1], [], []>} : vector<8x256xbf16>, vector<256x256xbf16>, vector<8x256xf32> -> vector<8x256xf32>
    %c0_9 = arith.constant 0 : index
    %c0_10 = arith.constant 0 : index
    %14 = vector.load %arg5[%c0_9, %c0_10] : memref<1x256xf32, #tpu.memory_space<vmem>>, vector<1x256xf32>
    %15 = vector.broadcast %14 : vector<1x256xf32> to vector<8x256xf32>
    %16 = arith.addf %13, %15 : vector<8x256xf32>
    %cst_11 = arith.constant 0.000000e+00 : f32
    %17 = vector.broadcast %cst_11 : f32 to vector<8x256xf32>
    %18 = arith.maximumf %16, %17 : vector<8x256xf32>
    %19 = arith.truncf %18 : vector<8x256xf32> to vector<8x256xbf16>
    %c0_12 = arith.constant 0 : index
    %c0_13 = arith.constant 0 : index
    %20 = vector.load %arg6[%c0_12, %c0_13] : memref<256x128xbf16, #tpu.memory_space<vmem>>, vector<256x128xbf16>
    %cst_14 = arith.constant dense<0.000000e+00> : vector<8x128xf32>
    %21 = tpu.matmul %19, %20, %cst_14 {dimension_numbers = #tpu.dot_dimension_numbers<[1], [0], [0], [1], [0, 0, 1, 1], [], []>} : vector<8x256xbf16>, vector<256x128xbf16>, vector<8x128xf32> -> vector<8x128xf32>
    %c0_15 = arith.constant 0 : index
    %c0_16 = arith.constant 0 : index
    %22 = vector.load %arg7[%c0_15, %c0_16] : memref<1x128xf32, #tpu.memory_space<vmem>>, vector<1x128xf32>
    %23 = vector.broadcast %22 : vector<1x128xf32> to vector<8x128xf32>
    %24 = arith.addf %21, %23 : vector<8x128xf32>
    %c0_17 = arith.constant 0 : index
    %c0_18 = arith.constant 0 : index
    %25 = vector.load %arg8[%c0_17, %c0_18] : memref<256x512xbf16, #tpu.memory_space<vmem>>, vector<256x512xbf16>
    %cst_19 = arith.constant dense<0.000000e+00> : vector<8x512xf32>
    %26 = tpu.matmul %19, %25, %cst_19 {dimension_numbers = #tpu.dot_dimension_numbers<[1], [0], [0], [1], [0, 0, 1, 1], [], []>} : vector<8x256xbf16>, vector<256x512xbf16>, vector<8x512xf32> -> vector<8x512xf32>
    %27 = arith.addf %11, %26 : vector<8x512xf32>
    %c0_20 = arith.constant 0 : index
    %c0_21 = arith.constant 0 : index
    %28 = vector.load %arg9[%c0_20, %c0_21] : memref<1x512xf32, #tpu.memory_space<vmem>>, vector<1x512xf32>
    %29 = vector.broadcast %28 : vector<1x512xf32> to vector<8x512xf32>
    %30 = arith.addf %27, %29 : vector<8x512xf32>
    %cst_22 = arith.constant 0.000000e+00 : f32
    %31 = vector.broadcast %cst_22 : f32 to vector<8x512xf32>
    %32 = arith.maximumf %30, %31 : vector<8x512xf32>
    %33 = arith.truncf %32 : vector<8x512xf32> to vector<8x512xbf16>
    %c0_23 = arith.constant 0 : index
    %c0_24 = arith.constant 0 : index
    %34 = vector.load %arg10[%c0_23, %c0_24] : memref<512x128xbf16, #tpu.memory_space<vmem>>, vector<512x128xbf16>
    %cst_25 = arith.constant dense<0.000000e+00> : vector<8x128xf32>
    %35 = tpu.matmul %33, %34, %cst_25 {dimension_numbers = #tpu.dot_dimension_numbers<[1], [0], [0], [1], [0, 0, 1, 1], [], []>} : vector<8x512xbf16>, vector<512x128xbf16>, vector<8x128xf32> -> vector<8x128xf32>
    %c0_26 = arith.constant 0 : index
    %c0_27 = arith.constant 0 : index
    %36 = vector.load %arg11[%c0_26, %c0_27] : memref<1x128xf32, #tpu.memory_space<vmem>>, vector<1x128xf32>
    %37 = vector.broadcast %36 : vector<1x128xf32> to vector<8x128xf32>
    %38 = arith.addf %35, %37 : vector<8x128xf32>
    %39 = tpu.iota {dimensions = array<i32: 1>} : vector<8x128xi32>
    %c32_i32 = arith.constant 32 : i32
    %40 = vector.broadcast %c32_i32 : i32 to vector<8x128xi32>
    %41 = arith.cmpi eq, %39, %40 : vector<8x128xi32>
    %c33_i32 = arith.constant 33 : i32
    %42 = vector.broadcast %c33_i32 : i32 to vector<8x128xi32>
    %43 = arith.cmpi eq, %39, %42 : vector<8x128xi32>
    %44 = arith.ori %41, %43 : vector<8x128xi1>
    %45 = arith.negf %38 : vector<8x128xf32>
    %46 = math.exp %45 : vector<8x128xf32>
    %cst_28 = arith.constant 1.000000e+00 : f32
    %47 = vector.broadcast %cst_28 : f32 to vector<8x128xf32>
    %48 = arith.addf %47, %46 : vector<8x128xf32>
    %49 = arith.divf %47, %48 : vector<8x128xf32>
    %cst_29 = arith.constant 0.000000e+00 : f32
    %50 = vector.broadcast %cst_29 : f32 to vector<8x128xf32>
    %51 = arith.select %44, %49, %50 : vector<8x128xi1>, vector<8x128xf32>
    %52 = arith.addf %24, %51 : vector<8x128xf32>
    %c0_30 = arith.constant 0 : index
    %c0_31 = arith.constant 0 : index
    %53 = vector.load %arg12[%c0_30, %c0_31] : memref<8x128xf32, #tpu.memory_space<vmem>>, vector<8x128xf32>
    tpu.vector_store %arg12[%c0_30, %c0_31], %52 {strides = array<i32>} : memref<8x128xf32, #tpu.memory_space<vmem>>, vector<8x128xf32>,
    return
  }
  func.func @transform_0(%arg0: i32) -> (i32, i32) {
    %c0_i32 = arith.constant 0 : i32
    %c0_i32_0 = arith.constant 0 : i32
    return %arg0, %c0_i32 : i32, i32
  }
  func.func @transform_1(%arg0: i32) -> (i32, i32) {
    %c0_i32 = arith.constant 0 : i32
    %c0_i32_0 = arith.constant 0 : i32
    %c0_i32_1 = arith.constant 0 : i32
    return %c0_i32, %c0_i32_0 : i32, i32
  }
  func.func @transform_2(%arg0: i32) -> (i32, i32) {
    %c0_i32 = arith.constant 0 : i32
    %c0_i32_0 = arith.constant 0 : i32
    %c0_i32_1 = arith.constant 0 : i32
    return %c0_i32, %c0_i32_0 : i32, i32
  }
  func.func @transform_3(%arg0: i32) -> (i32, i32) {
    %c0_i32 = arith.constant 0 : i32
    %c0_i32_0 = arith.constant 0 : i32
    %c0_i32_1 = arith.constant 0 : i32
    return %c0_i32, %c0_i32_0 : i32, i32
  }
  func.func @transform_4(%arg0: i32) -> (i32, i32) {
    %c0_i32 = arith.constant 0 : i32
    %c0_i32_0 = arith.constant 0 : i32
    %c0_i32_1 = arith.constant 0 : i32
    return %c0_i32, %c0_i32_0 : i32, i32
  }
  func.func @transform_5(%arg0: i32) -> (i32, i32) {
    %c0_i32 = arith.constant 0 : i32
    %c0_i32_0 = arith.constant 0 : i32
    %c0_i32_1 = arith.constant 0 : i32
    return %c0_i32, %c0_i32_0 : i32, i32
  }
  func.func @transform_6(%arg0: i32) -> (i32, i32) {
    %c0_i32 = arith.constant 0 : i32
    %c0_i32_0 = arith.constant 0 : i32
    %c0_i32_1 = arith.constant 0 : i32
    return %c0_i32, %c0_i32_0 : i32, i32
  }
  func.func @transform_7(%arg0: i32) -> (i32, i32) {
    %c0_i32 = arith.constant 0 : i32
    %c0_i32_0 = arith.constant 0 : i32
    %c0_i32_1 = arith.constant 0 : i32
    return %c0_i32, %c0_i32_0 : i32, i32
  }
  func.func @transform_8(%arg0: i32) -> (i32, i32) {
    %c0_i32 = arith.constant 0 : i32
    %c0_i32_0 = arith.constant 0 : i32
    %c0_i32_1 = arith.constant 0 : i32
    return %c0_i32, %c0_i32_0 : i32, i32
  }
  func.func @transform_9(%arg0: i32) -> (i32, i32) {
    %c0_i32 = arith.constant 0 : i32
    %c0_i32_0 = arith.constant 0 : i32
    %c0_i32_1 = arith.constant 0 : i32
    return %c0_i32, %c0_i32_0 : i32, i32
  }
  func.func @transform_10(%arg0: i32) -> (i32, i32) {
    %c0_i32 = arith.constant 0 : i32
    %c0_i32_0 = arith.constant 0 : i32
    %c0_i32_1 = arith.constant 0 : i32
    return %c0_i32, %c0_i32_0 : i32, i32
  }
  func.func @transform_11(%arg0: i32) -> (i32, i32) {
    %c0_i32 = arith.constant 0 : i32
    %c0_i32_0 = arith.constant 0 : i32
    return %arg0, %c0_i32 : i32, i32
  }
}

</mosaic_0001>

<llo_original>
// kernel: introspection_forward.1
$region0: #{introspection_forward.1}
  #allocation0 [shape = 'u32[]', space=smem, size = 0x4, offset = 0x4, fixed_abs, tag = 'smem constant byte address 0x4 - core index']
  #allocation1 [shape = 'u32[72,128]{1,0:T(1,128)}', space=vmem, size = 0x9000, scoped, tag = 'internal scratch']
  %s0 = inlined_call_operand.vmem [shape: f32[8,32], index: 0, kind: input, shape index: {}]
  %s1 = inlined_call_operand.vmem [shape: bf16[32,768], index: 1, kind: input, shape index: {}]
  %s2 = inlined_call_operand.vmem [shape: f32[1,256], index: 2, kind: input, shape index: {}]
  %s3 = inlined_call_operand.vmem [shape: bf16[256,256], index: 3, kind: input, shape index: {}]
  %s4 = inlined_call_operand.vmem [shape: f32[1,256], index: 4, kind: input, shape index: {}]
  %s5 = inlined_call_operand.vmem [shape: bf16[256,128], index: 5, kind: input, shape index: {}]
  %s6 = inlined_call_operand.vmem [shape: f32[1,128], index: 6, kind: input, shape index: {}]
  %s7 = inlined_call_operand.vmem [shape: bf16[256,512], index: 7, kind: input, shape index: {}]
  %s8 = inlined_call_operand.vmem [shape: f32[1,512], index: 8, kind: input, shape index: {}]
  %s9 = inlined_call_operand.vmem [shape: bf16[512,128], index: 9, kind: input, shape index: {}]
  %s10 = inlined_call_operand.vmem [shape: f32[1,128], index: 10, kind: input, shape index: {}]
  %s11 = inlined_call_operand.vmem [shape: f32[8,128], index: 11, kind: output, shape index: {}]
  %s12 = sld [smem:[#allocation0]]
  $region54: #{introspection_forward.1} parent=0
    _
  %s14 = ssub.s32 1, %s12
  %s15 = scalar_select 0, %s14, %s12
  // Predicated region
  $region2: #{introspection_forward.1} parent=0 // pred_check
    _
  $region3: #{introspection_forward.1} parent=0 // pred_check_branch
    %17 = sbr.rel (0) target = $region5
  $region4: #{introspection_forward.1} parent=0 // pred_region
    _
  $region5: #{introspection_forward.1} parent=0 // pred_fallthru
    _
  // Predicated region
  $region6: #{introspection_forward.1} parent=0 // pred_check
    _
  $region7: #{introspection_forward.1} parent=0 // pred_check_branch
    %19 = sbr.rel (0) target = $region9
  $region8: #{introspection_forward.1} parent=0 // pred_region
    _
  $region9: #{introspection_forward.1} parent=0 // pred_fallthru
    _
  // Predicated region
  $region10: #{introspection_forward.1} parent=0 // pred_check
    _
  $region11: #{introspection_forward.1} parent=0 // pred_check_branch
    %21 = sbr.rel (0) target = $region13
  $region12: #{introspection_forward.1} parent=0 // pred_region
    _
  $region13: #{introspection_forward.1} parent=0 // pred_fallthru
    _
  // Predicated region
  $region14: #{introspection_forward.1} parent=0 // pred_check
    _
  $region15: #{introspection_forward.1} parent=0 // pred_check_branch
    %23 = sbr.rel (0) target = $region17
  $region16: #{introspection_forward.1} parent=0 // pred_region
    _
  $region17: #{introspection_forward.1} parent=0 // pred_fallthru
    _
  // Predicated region
  $region18: #{introspection_forward.1} parent=0 // pred_check
    _
  $region19: #{introspection_forward.1} parent=0 // pred_check_branch
    %25 = sbr.rel (0) target = $region21
  $region20: #{introspection_forward.1} parent=0 // pred_region
    _
  $region21: #{introspection_forward.1} parent=0 // pred_fallthru
    _
  // Predicated region
  $region22: #{introspection_forward.1} parent=0 // pred_check
    _
  $region23: #{introspection_forward.1} parent=0 // pred_check_branch
    %27 = sbr.rel (0) target = $region25
  $region24: #{introspection_forward.1} parent=0 // pred_region
    _
  $region25: #{introspection_forward.1} parent=0 // pred_fallthru
    _
  // Predicated region
  $region26: #{introspection_forward.1} parent=0 // pred_check
    _
  $region27: #{introspection_forward.1} parent=0 // pred_check_branch
    %29 = sbr.rel (0) target = $region29
  $region28: #{introspection_forward.1} parent=0 // pred_region
    _
  $region29: #{introspection_forward.1} parent=0 // pred_fallthru
    _
  // Predicated region
  $region30: #{introspection_forward.1} parent=0 // pred_check
    _
  $region31: #{introspection_forward.1} parent=0 // pred_check_branch
    %31 = sbr.rel (0) target = $region33
  $region32: #{introspection_forward.1} parent=0 // pred_region
    _
  $region33: #{introspection_forward.1} parent=0 // pred_fallthru
    _
  // Predicated region
  $region34: #{introspection_forward.1} parent=0 // pred_check
    _
  $region35: #{introspection_forward.1} parent=0 // pred_check_branch
    %33 = sbr.rel (0) target = $region37
  $region36: #{introspection_forward.1} parent=0 // pred_region
    _
  $region37: #{introspection_forward.1} parent=0 // pred_fallthru
    _
  // Predicated region
  $region38: #{introspection_forward.1} parent=0 // pred_check
    _
  $region39: #{introspection_forward.1} parent=0 // pred_check_branch
    %35 = sbr.rel (0) target = $region41
  $region40: #{introspection_forward.1} parent=0 // pred_region
    _
  $region41: #{introspection_forward.1} parent=0 // pred_fallthru
    _
  // Predicated region
  $region42: #{introspection_forward.1} parent=0 // pred_check
    _
  $region43: #{introspection_forward.1} parent=0 // pred_check_branch
    %37 = sbr.rel (0) target = $region45
  $region44: #{introspection_forward.1} parent=0 // pred_region
    _
  $region45: #{introspection_forward.1} parent=0 // pred_fallthru
    _
  %v39 = vld [vmem:[%s0] sm:$0xff]
  %v40 = vpack.c.bf16 %v39, %v39
  %v41 = vld [vmem:[%s1] sm:$0xff]
  %v42 = vld [vmem:[%s1 + $0x8] sm:$0xff]
  %v43 = vld [vmem:[%s1 + $0x10] sm:$0xff]
  %v44 = vld [vmem:[%s1 + $0x18] sm:$0xff]
  %v45 = vld [vmem:[%s1 + $0x20] sm:$0xff]
  %v46 = vld [vmem:[%s1 + $0x28] sm:$0xff]
  %v47 = vld [vmem:[%s1 + $0x30] sm:$0xff]
  %v48 = vld [vmem:[%s1 + $0x38] sm:$0xff]
  %v49 = vld [vmem:[%s1 + $0x40] sm:$0xff]
  %v50 = vld [vmem:[%s1 + $0x48] sm:$0xff]
  %v51 = vld [vmem:[%s1 + $0x50] sm:$0xff]
  %v52 = vld [vmem:[%s1 + $0x58] sm:$0xff]
  %v65 = vunpack.c.l.b16 %v41
  %v66 = vunpack.c.h.b16 %v41
  %v67 = vunpack.c.l.b16 %v42
  %v68 = vunpack.c.h.b16 %v42
  %v69 = vunpack.c.l.b16 %v43
  %v70 = vunpack.c.h.b16 %v43
  %v71 = vunpack.c.l.b16 %v44
  %v72 = vunpack.c.h.b16 %v44
  %v73 = vunpack.c.l.b16 %v45
  %v74 = vunpack.c.h.b16 %v45
  %v75 = vunpack.c.l.b16 %v46
  %v76 = vunpack.c.h.b16 %v46
  %v77 = vunpack.c.l.b16 %v47
  %v78 = vunpack.c.h.b16 %v47
  %v79 = vunpack.c.l.b16 %v48
  %v80 = vunpack.c.h.b16 %v48
  %v81 = vunpack.c.l.b16 %v49
  %v82 = vunpack.c.h.b16 %v49
  %v83 = vunpack.c.l.b16 %v50
  %v84 = vunpack.c.h.b16 %v50
  %v85 = vunpack.c.l.b16 %v51
  %v86 = vunpack.c.h.b16 %v51
  %v87 = vunpack.c.l.b16 %v52
  %v88 = vunpack.c.h.b16 %v52
  %v89 = vpack.c.b16 %v71, %v65
  %v90 = vpack.c.b16 %v72, %v66
  %v91 = vpack.c.b16 %v73, %v67
  %v92 = vpack.c.b16 %v74, %v68
  %v93 = vpack.c.b16 %v75, %v69
  %v94 = vpack.c.b16 %v76, %v70
  %v95 = vpack.c.b16 %v83, %v77
  %v96 = vpack.c.b16 %v84, %v78
  %v97 = vpack.c.b16 %v85, %v79
  %v98 = vpack.c.b16 %v86, %v80
  %v99 = vpack.c.b16 %v87, %v81
  %v100 = vpack.c.b16 %v88, %v82
  %vm113 = vcmask 261120
  %v115 = vsel %vm113, %v40, 0
  %117 = vmatpush.bf16.msra.mxu0 0
  %118 = vmatpush.bf16.msra.mxu0 0
  %119 = vmatpush.bf16.msra.mxu0 0
  %120 = vmatpush.bf16.msra.mxu0 0
  %121 = vmatpush.bf16.msra.mxu0 0
  %122 = vmatpush.bf16.msra.mxu0 0
  %123 = vmatpush.bf16.msra.mxu0 %v95
  %124 = vmatpush.bf16.msra.mxu0 %v89
  %125 = vmatmul.bf16.gmra.mxu0 %v115
  %v126 = vpop.f32.mrf.mxu0
  %v127 = vadd.f32 0.0, %v126
  %v128 = vpop.f32.mrf.mxu0
  %129 = vdwg.mxu0
  %130 = vmatpush.bf16.msra.mxu0 0
  %131 = vmatpush.bf16.msra.mxu0 0
  %132 = vmatpush.bf16.msra.mxu0 0
  %133 = vmatpush.bf16.msra.mxu0 0
  %134 = vmatpush.bf16.msra.mxu0 0
  %135 = vmatpush.bf16.msra.mxu0 0
  %136 = vmatpush.bf16.msra.mxu0 %v96
  %137 = vmatpush.bf16.msra.mxu0 %v90
  %138 = vmatmul.bf16.gmra.mxu0 %v115
  %v139 = vpop.f32.mrf.mxu0
  %v140 = vadd.f32 0.0, %v139
  %v141 = vpop.f32.mrf.mxu0
  %142 = vdwg.mxu0
  %143 = vmatpush.bf16.msra.mxu0 0
  %144 = vmatpush.bf16.msra.mxu0 0
  %145 = vmatpush.bf16.msra.mxu0 0
  %146 = vmatpush.bf16.msra.mxu0 0
  %147 = vmatpush.bf16.msra.mxu0 0
  %148 = vmatpush.bf16.msra.mxu0 0
  %149 = vmatpush.bf16.msra.mxu0 %v97
  %150 = vmatpush.bf16.msra.mxu0 %v91
  %151 = vmatmul.bf16.gmra.mxu0 %v115
  %v152 = vpop.f32.mrf.mxu0
  %v153 = vadd.f32 0.0, %v152
  %v154 = vpop.f32.mrf.mxu0
  %155 = vdwg.mxu0
  %156 = vmatpush.bf16.msra.mxu0 0
  %157 = vmatpush.bf16.msra.mxu0 0
  %158 = vmatpush.bf16.msra.mxu0 0
  %159 = vmatpush.bf16.msra.mxu0 0
  %160 = vmatpush.bf16.msra.mxu0 0
  %161 = vmatpush.bf16.msra.mxu0 0
  %162 = vmatpush.bf16.msra.mxu0 %v98
  %163 = vmatpush.bf16.msra.mxu0 %v92
  %164 = vmatmul.bf16.gmra.mxu0 %v115
  %v165 = vpop.f32.mrf.mxu0
  %v166 = vadd.f32 0.0, %v165
  %v167 = vpop.f32.mrf.mxu0
  %168 = vdwg.mxu0
  %169 = vmatpush.bf16.msra.mxu0 0
  %170 = vmatpush.bf16.msra.mxu0 0
  %171 = vmatpush.bf16.msra.mxu0 0
  %172 = vmatpush.bf16.msra.mxu0 0
  %173 = vmatpush.bf16.msra.mxu0 0
  %174 = vmatpush.bf16.msra.mxu0 0
  %175 = vmatpush.bf16.msra.mxu0 %v99
  %176 = vmatpush.bf16.msra.mxu0 %v93
  %177 = vmatmul.bf16.gmra.mxu0 %v115
  %v178 = vpop.f32.mrf.mxu0
  %v179 = vadd.f32 0.0, %v178
  %v180 = vpop.f32.mrf.mxu0
  %181 = vdwg.mxu0
  %182 = vmatpush.bf16.msra.mxu0 0
  %183 = vmatpush.bf16.msra.mxu0 0
  %184 = vmatpush.bf16.msra.mxu0 0
  %185 = vmatpush.bf16.msra.mxu0 0
  %186 = vmatpush.bf16.msra.mxu0 0
  %187 = vmatpush.bf16.msra.mxu0 0
  %188 = vmatpush.bf16.msra.mxu0 %v100
  %189 = vmatpush.bf16.msra.mxu0 %v94
  %190 = vmatmul.bf16.gmra.mxu0 %v115
  %v191 = vpop.f32.mrf.mxu0
  %v192 = vadd.f32 0.0, %v191
  %v193 = vpop.f32.mrf.mxu0
  %194 = vdwg.mxu0
  %v195 = vld [vmem:[%s2] sm:$0x3]
  %v197 = vperm.slane %v195, 0
  %v198 = vperm.slane %v195, 1
  %v201 = vadd.f32 %v127, %v197
  %v202 = vadd.f32 %v140, %v198
  %v203 = vmax.f32 %v201, 0.0
  %v204 = vmax.f32 %v202, 0.0
  %v205 = vpack.c.bf16 %v203, %v203
  %v206 = vpack.c.bf16 %v204, %v204
  %v207 = vld [vmem:[%s3] sm:$0xff]
  %v208 = vld [vmem:[%s3 + $0x8] sm:$0xff]
  %v209 = vld [vmem:[%s3 + $0x10] sm:$0xff]
  %v210 = vld [vmem:[%s3 + $0x18] sm:$0xff]
  %v211 = vld [vmem:[%s3 + $0x20] sm:$0xff]
  %v212 = vld [vmem:[%s3 + $0x28] sm:$0xff]
  %v213 = vld [vmem:[%s3 + $0x30] sm:$0xff]
  %v214 = vld [vmem:[%s3 + $0x38] sm:$0xff]
  %v215 = vld [vmem:[%s3 + $0x40] sm:$0xff]
  %v216 = vld [vmem:[%s3 + $0x48] sm:$0xff]
  %v217 = vld [vmem:[%s3 + $0x50] sm:$0xff]
  %v218 = vld [vmem:[%s3 + $0x58] sm:$0xff]
  %v219 = vld [vmem:[%s3 + $0x60] sm:$0xff]
  %v220 = vld [vmem:[%s3 + $0x68] sm:$0xff]
  %v221 = vld [vmem:[%s3 + $0x70] sm:$0xff]
  %v222 = vld [vmem:[%s3 + $0x78] sm:$0xff]
  %v223 = vld [vmem:[%s3 + $0x80] sm:$0xff]
  %v224 = vld [vmem:[%s3 + $0x88] sm:$0xff]
  %v225 = vld [vmem:[%s3 + $0x90] sm:$0xff]
  %v226 = vld [vmem:[%s3 + $0x98] sm:$0xff]
  %v227 = vld [vmem:[%s3 + $0xa0] sm:$0xff]
  %v228 = vld [vmem:[%s3 + $0xa8] sm:$0xff]
  %v229 = vld [vmem:[%s3 + $0xb0] sm:$0xff]
  %v230 = vld [vmem:[%s3 + $0xb8] sm:$0xff]
  %v231 = vld [vmem:[%s3 + $0xc0] sm:$0xff]
  %v232 = vld [vmem:[%s3 + $0xc8] sm:$0xff]
  %v233 = vld [vmem:[%s3 + $0xd0] sm:$0xff]
  %v234 = vld [vmem:[%s3 + $0xd8] sm:$0xff]
  %v235 = vld [vmem:[%s3 + $0xe0] sm:$0xff]
  %v236 = vld [vmem:[%s3 + $0xe8] sm:$0xff]
  %v237 = vld [vmem:[%s3 + $0xf0] sm:$0xff]
  %v238 = vld [vmem:[%s3 + $0xf8] sm:$0xff]
  %v239 = vld [vmem:[%s4] sm:$0x3]
  %v241 = vperm.slane %v239, 0
  %v242 = vperm.slane %v239, 1
  %v277 = vunpack.c.l.b16 %v207
  %v278 = vunpack.c.h.b16 %v207
  %v279 = vunpack.c.l.b16 %v208
  %v280 = vunpack.c.h.b16 %v208
  %v281 = vunpack.c.l.b16 %v209
  %v282 = vunpack.c.h.b16 %v209
  %v283 = vunpack.c.l.b16 %v210
  %v284 = vunpack.c.h.b16 %v210
  %v285 = vunpack.c.l.b16 %v211
  %v286 = vunpack.c.h.b16 %v211
  %v287 = vunpack.c.l.b16 %v212
  %v288 = vunpack.c.h.b16 %v212
  %v289 = vunpack.c.l.b16 %v213
  %v290 = vunpack.c.h.b16 %v213
  %v291 = vunpack.c.l.b16 %v214
  %v292 = vunpack.c.h.b16 %v214
  %v293 = vunpack.c.l.b16 %v215
  %v294 = vunpack.c.h.b16 %v215
  %v295 = vunpack.c.l.b16 %v216
  %v296 = vunpack.c.h.b16 %v216
  %v297 = vunpack.c.l.b16 %v217
  %v298 = vunpack.c.h.b16 %v217
  %v299 = vunpack.c.l.b16 %v218
  %v300 = vunpack.c.h.b16 %v218
  %v301 = vunpack.c.l.b16 %v219
  %v302 = vunpack.c.h.b16 %v219
  %v303 = vunpack.c.l.b16 %v220
  %v304 = vunpack.c.h.b16 %v220
  %v305 = vunpack.c.l.b16 %v221
  %v306 = vunpack.c.h.b16 %v221
  %v307 = vunpack.c.l.b16 %v222
  %v308 = vunpack.c.h.b16 %v222
  %v309 = vunpack.c.l.b16 %v223
  %v310 = vunpack.c.h.b16 %v223
  %v311 = vunpack.c.l.b16 %v224
  %v312 = vunpack.c.h.b16 %v224
  %v313 = vunpack.c.l.b16 %v225
  %v314 = vunpack.c.h.b16 %v225
  %v315 = vunpack.c.l.b16 %v226
  %v316 = vunpack.c.h.b16 %v226
  %v317 = vunpack.c.l.b16 %v227
  %v318 = vunpack.c.h.b16 %v227
  %v319 = vunpack.c.l.b16 %v228
  %v320 = vunpack.c.h.b16 %v228
  %v321 = vunpack.c.l.b16 %v229
  %v322 = vunpack.c.h.b16 %v229
  %v323 = vunpack.c.l.b16 %v230
  %v324 = vunpack.c.h.b16 %v230
  %v325 = vunpack.c.l.b16 %v231
  %v326 = vunpack.c.h.b16 %v231
  %v327 = vunpack.c.l.b16 %v232
  %v328 = vunpack.c.h.b16 %v232
  %v329 = vunpack.c.l.b16 %v233
  %v330 = vunpack.c.h.b16 %v233
  %v331 = vunpack.c.l.b16 %v234
  %v332 = vunpack.c.h.b16 %v234
  %v333 = vunpack.c.l.b16 %v235
  %v334 = vunpack.c.h.b16 %v235
  %v335 = vunpack.c.l.b16 %v236
  %v336 = vunpack.c.h.b16 %v236
  %v337 = vunpack.c.l.b16 %v237
  %v338 = vunpack.c.h.b16 %v237
  %v339 = vunpack.c.l.b16 %v238
  %v340 = vunpack.c.h.b16 %v238
  %v341 = vpack.c.b16 %v279, %v277
  %v342 = vpack.c.b16 %v280, %v278
  %v343 = vpack.c.b16 %v283, %v281
  %v344 = vpack.c.b16 %v284, %v282
  %v345 = vpack.c.b16 %v287, %v285
  %v346 = vpack.c.b16 %v288, %v286
  %v347 = vpack.c.b16 %v291, %v289
  %v348 = vpack.c.b16 %v292, %v290
  %v349 = vpack.c.b16 %v295, %v293
  %v350 = vpack.c.b16 %v296, %v294
  %v351 = vpack.c.b16 %v299, %v297
  %v352 = vpack.c.b16 %v300, %v298
  %v353 = vpack.c.b16 %v303, %v301
  %v354 = vpack.c.b16 %v304, %v302
  %v355 = vpack.c.b16 %v307, %v305
  %v356 = vpack.c.b16 %v308, %v306
  %v357 = vpack.c.b16 %v311, %v309
  %v358 = vpack.c.b16 %v312, %v310
  %v359 = vpack.c.b16 %v315, %v313
  %v360 = vpack.c.b16 %v316, %v314
  %v361 = vpack.c.b16 %v319, %v317
  %v362 = vpack.c.b16 %v320, %v318
  %v363 = vpack.c.b16 %v323, %v321
  %v364 = vpack.c.b16 %v324, %v322
  %v365 = vpack.c.b16 %v327, %v325
  %v366 = vpack.c.b16 %v328, %v326
  %v367 = vpack.c.b16 %v331, %v329
  %v368 = vpack.c.b16 %v332, %v330
  %v369 = vpack.c.b16 %v335, %v333
  %v370 = vpack.c.b16 %v336, %v334
  %v371 = vpack.c.b16 %v339, %v337
  %v372 = vpack.c.b16 %v340, %v338
  %405 = vmatpush.bf16.msra.mxu0 %v355
  %406 = vmatpush.bf16.msra.mxu0 %v353
  %407 = vmatpush.bf16.msra.mxu0 %v351
  %408 = vmatpush.bf16.msra.mxu0 %v349
  %409 = vmatpush.bf16.msra.mxu0 %v347
  %410 = vmatpush.bf16.msra.mxu0 %v345
  %411 = vmatpush.bf16.msra.mxu0 %v343
  %412 = vmatpush.bf16.msra.mxu0 %v341
  %413 = vmatmul.bf16.gmra.mxu0 %v205
  %v414 = vpop.f32.mrf.mxu0
  %v415 = vadd.f32 %v241, %v414
  %v416 = vpop.f32.mrf.mxu0
  %417 = vdwg.mxu0
  %418 = vmatpush.bf16.msra.mxu0 %v371
  %419 = vmatpush.bf16.msra.mxu0 %v369
  %420 = vmatpush.bf16.msra.mxu0 %v367
  %421 = vmatpush.bf16.msra.mxu0 %v365
  %422 = vmatpush.bf16.msra.mxu0 %v363
  %423 = vmatpush.bf16.msra.mxu0 %v361
  %424 = vmatpush.bf16.msra.mxu0 %v359
  %425 = vmatpush.bf16.msra.mxu0 %v357
  %426 = vmatmul.bf16.gmra.mxu0 %v206
  %v427 = vpop.f32.mrf.mxu0
  %v428 = vadd.f32 %v415, %v427
  %v429 = vpop.f32.mrf.mxu0
  %430 = vdwg.mxu0
  %431 = vmatpush.bf16.msra.mxu0 %v356
  %432 = vmatpush.bf16.msra.mxu0 %v354
  %433 = vmatpush.bf16.msra.mxu0 %v352
  %434 = vmatpush.bf16.msra.mxu0 %v350
  %435 = vmatpush.bf16.msra.mxu0 %v348
  %436 = vmatpush.bf16.msra.mxu0 %v346
  %437 = vmatpush.bf16.msra.mxu0 %v344
  %438 = vmatpush.bf16.msra.mxu0 %v342
  %439 = vmatmul.bf16.gmra.mxu0 %v205
  %v440 = vpop.f32.mrf.mxu0
  %v441 = vadd.f32 %v242, %v440
  %v442 = vpop.f32.mrf.mxu0
  %443 = vdwg.mxu0
  %444 = vmatpush.bf16.msra.mxu0 %v372
  %445 = vmatpush.bf16.msra.mxu0 %v370
  %446 = vmatpush.bf16.msra.mxu0 %v368
  %447 = vmatpush.bf16.msra.mxu0 %v366
  %448 = vmatpush.bf16.msra.mxu0 %v364
  %449 = vmatpush.bf16.msra.mxu0 %v362
  %450 = vmatpush.bf16.msra.mxu0 %v360
  %451 = vmatpush.bf16.msra.mxu0 %v358
  %452 = vmatmul.bf16.gmra.mxu0 %v206
  %v453 = vpop.f32.mrf.mxu0
  %v454 = vadd.f32 %v441, %v453
  %v455 = vpop.f32.mrf.mxu0
  %456 = vdwg.mxu0
  %v457 = vmax.f32 %v428, 0.0
  %v458 = vmax.f32 %v454, 0.0
  %v459 = vpack.c.bf16 %v457, %v457
  %v460 = vpack.c.bf16 %v458, %v458
  %v461 = vld [vmem:[%s5] sm:$0xf]
  %v462 = vld [vmem:[%s5 + $0x4] sm:$0xf]
  %v463 = vld [vmem:[%s5 + $0x8] sm:$0xf]
  %v464 = vld [vmem:[%s5 + $0xc] sm:$0xf]
  %v465 = vld [vmem:[%s5 + $0x10] sm:$0xf]
  %v466 = vld [vmem:[%s5 + $0x14] sm:$0xf]
  %v467 = vld [vmem:[%s5 + $0x18] sm:$0xf]
  %v468 = vld [vmem:[%s5 + $0x1c] sm:$0xf]
  %v469 = vld [vmem:[%s5 + $0x20] sm:$0xf]
  %v470 = vld [vmem:[%s5 + $0x24] sm:$0xf]
  %v471 = vld [vmem:[%s5 + $0x28] sm:$0xf]
  %v472 = vld [vmem:[%s5 + $0x2c] sm:$0xf]
  %v473 = vld [vmem:[%s5 + $0x30] sm:$0xf]
  %v474 = vld [vmem:[%s5 + $0x34] sm:$0xf]
  %v475 = vld [vmem:[%s5 + $0x38] sm:$0xf]
  %v476 = vld [vmem:[%s5 + $0x3c] sm:$0xf]
  %v477 = vld [vmem:[%s5 + $0x40] sm:$0xf]
  %v478 = vld [vmem:[%s5 + $0x44] sm:$0xf]
  %v479 = vld [vmem:[%s5 + $0x48] sm:$0xf]
  %v480 = vld [vmem:[%s5 + $0x4c] sm:$0xf]
  %v481 = vld [vmem:[%s5 + $0x50] sm:$0xf]
  %v482 = vld [vmem:[%s5 + $0x54] sm:$0xf]
  %v483 = vld [vmem:[%s5 + $0x58] sm:$0xf]
  %v484 = vld [vmem:[%s5 + $0x5c] sm:$0xf]
  %v485 = vld [vmem:[%s5 + $0x60] sm:$0xf]
  %v486 = vld [vmem:[%s5 + $0x64] sm:$0xf]
  %v487 = vld [vmem:[%s5 + $0x68] sm:$0xf]
  %v488 = vld [vmem:[%s5 + $0x6c] sm:$0xf]
  %v489 = vld [vmem:[%s5 + $0x70] sm:$0xf]
  %v490 = vld [vmem:[%s5 + $0x74] sm:$0xf]
  %v491 = vld [vmem:[%s5 + $0x78] sm:$0xf]
  %v492 = vld [vmem:[%s5 + $0x7c] sm:$0xf]
  %v493 = vld [vmem:[%s6] sm:$0x1]
  %v495 = vperm.slane %v493, 0
  %v529 = vunpack.c.l.b16 %v461
  %v530 = vunpack.c.l.b16 %v462
  %v531 = vunpack.c.l.b16 %v463
  %v532 = vunpack.c.l.b16 %v464
  %v533 = vunpack.c.l.b16 %v465
  %v534 = vunpack.c.l.b16 %v466
  %v535 = vunpack.c.l.b16 %v467
  %v536 = vunpack.c.l.b16 %v468
  %v537 = vunpack.c.l.b16 %v469
  %v538 = vunpack.c.l.b16 %v470
  %v539 = vunpack.c.l.b16 %v471
  %v540 = vunpack.c.l.b16 %v472
  %v541 = vunpack.c.l.b16 %v473
  %v542 = vunpack.c.l.b16 %v474
  %v543 = vunpack.c.l.b16 %v475
  %v544 = vunpack.c.l.b16 %v476
  %v545 = vunpack.c.l.b16 %v477
  %v546 = vunpack.c.l.b16 %v478
  %v547 = vunpack.c.l.b16 %v479
  %v548 = vunpack.c.l.b16 %v480
  %v549 = vunpack.c.l.b16 %v481
  %v550 = vunpack.c.l.b16 %v482
  %v551 = vunpack.c.l.b16 %v483
  %v552 = vunpack.c.l.b16 %v484
  %v553 = vunpack.c.l.b16 %v485
  %v554 = vunpack.c.l.b16 %v486
  %v555 = vunpack.c.l.b16 %v487
  %v556 = vunpack.c.l.b16 %v488
  %v557 = vunpack.c.l.b16 %v489
  %v558 = vunpack.c.l.b16 %v490
  %v559 = vunpack.c.l.b16 %v491
  %v560 = vunpack.c.l.b16 %v492
  %v561 = vpack.c.b16 %v530, %v529
  %v562 = vpack.c.b16 %v532, %v531
  %v563 = vpack.c.b16 %v534, %v533
  %v564 = vpack.c.b16 %v536, %v535
  %v565 = vpack.c.b16 %v538, %v537
  %v566 = vpack.c.b16 %v540, %v539
  %v567 = vpack.c.b16 %v542, %v541
  %v568 = vpack.c.b16 %v544, %v543
  %v569 = vpack.c.b16 %v546, %v545
  %v570 = vpack.c.b16 %v548, %v547
  %v571 = vpack.c.b16 %v550, %v549
  %v572 = vpack.c.b16 %v552, %v551
  %v573 = vpack.c.b16 %v554, %v553
  %v574 = vpack.c.b16 %v556, %v555
  %v575 = vpack.c.b16 %v558, %v557
  %v576 = vpack.c.b16 %v560, %v559
  %593 = vmatpush.bf16.msra.mxu0 %v568
  %594 = vmatpush.bf16.msra.mxu0 %v567
  %595 = vmatpush.bf16.msra.mxu0 %v566
  %596 = vmatpush.bf16.msra.mxu0 %v565
  %597 = vmatpush.bf16.msra.mxu0 %v564
  %598 = vmatpush.bf16.msra.mxu0 %v563
  %599 = vmatpush.bf16.msra.mxu0 %v562
  %600 = vmatpush.bf16.msra.mxu0 %v561
  %601 = vmatmul.bf16.gmra.mxu0 %v459
  %v602 = vpop.f32.mrf.mxu0
  %v603 = vadd.f32 %v495, %v602
  %v604 = vpop.f32.mrf.mxu0
  %605 = vdwg.mxu0
  %606 = vmatpush.bf16.msra.mxu0 %v576
  %607 = vmatpush.bf16.msra.mxu0 %v575
  %608 = vmatpush.bf16.msra.mxu0 %v574
  %609 = vmatpush.bf16.msra.mxu0 %v573
  %610 = vmatpush.bf16.msra.mxu0 %v572
  %611 = vmatpush.bf16.msra.mxu0 %v571
  %612 = vmatpush.bf16.msra.mxu0 %v570
  %613 = vmatpush.bf16.msra.mxu0 %v569
  %614 = vmatmul.bf16.gmra.mxu0 %v460
  %v615 = vpop.f32.mrf.mxu0
  %v616 = vadd.f32 %v603, %v615
  %v617 = vpop.f32.mrf.mxu0
  %618 = vdwg.mxu0
  %v619 = vld [vmem:[%s7] sm:$0xff]
  %v620 = vld [vmem:[%s7 + $0x8] sm:$0xff]
  %v621 = vld [vmem:[%s7 + $0x10] sm:$0xff]
  %v622 = vld [vmem:[%s7 + $0x18] sm:$0xff]
  %v623 = vld [vmem:[%s7 + $0x20] sm:$0xff]
  %v624 = vld [vmem:[%s7 + $0x28] sm:$0xff]
  %v625 = vld [vmem:[%s7 + $0x30] sm:$0xff]
  %v626 = vld [vmem:[%s7 + $0x38] sm:$0xff]
  %v627 = vld [vmem:[%s7 + $0x40] sm:$0xff]
  %v628 = vld [vmem:[%s7 + $0x48] sm:$0xff]
  %v629 = vld [vmem:[%s7 + $0x50] sm:$0xff]
  %v630 = vld [vmem:[%s7 + $0x58] sm:$0xff]
  %v631 = vld [vmem:[%s7 + $0x60] sm:$0xff]
  %v632 = vld [vmem:[%s7 + $0x68] sm:$0xff]
  %v633 = vld [vmem:[%s7 + $0x70] sm:$0xff]
  %v634 = vld [vmem:[%s7 + $0x78] sm:$0xff]
  %v635 = vld [vmem:[%s7 + $0x80] sm:$0xff]
  %v636 = vld [vmem:[%s7 + $0x88] sm:$0xff]
  %v637 = vld [vmem:[%s7 + $0x90] sm:$0xff]
  %v638 = vld [vmem:[%s7 + $0x98] sm:$0xff]
  %v639 = vld [vmem:[%s7 + $0xa0] sm:$0xff]
  %v640 = vld [vmem:[%s7 + $0xa8] sm:$0xff]
  %v641 = vld [vmem:[%s7 + $0xb0] sm:$0xff]
  %v642 = vld [vmem:[%s7 + $0xb8] sm:$0xff]
  %v643 = vld [vmem:[%s7 + $0xc0] sm:$0xff]
  %v644 = vld [vmem:[%s7 + $0xc8] sm:$0xff]
  %v645 = vld [vmem:[%s7 + $0xd0] sm:$0xff]
  %v646 = vld [vmem:[%s7 + $0xd8] sm:$0xff]
  %v647 = vld [vmem:[%s7 + $0xe0] sm:$0xff]
  %v648 = vld [vmem:[%s7 + $0xe8] sm:$0xff]
  %v649 = vld [vmem:[%s7 + $0xf0] sm:$0xff]
  %v650 = vld [vmem:[%s7 + $0xf8] sm:$0xff]
  %v651 = vld [vmem:[%s7 + $0x100] sm:$0xff]
  %v652 = vld [vmem:[%s7 + $0x108] sm:$0xff]
  %v653 = vld [vmem:[%s7 + $0x110] sm:$0xff]
  %v654 = vld [vmem:[%s7 + $0x118] sm:$0xff]
  %v655 = vld [vmem:[%s7 + $0x120] sm:$0xff]
  %v656 = vld [vmem:[%s7 + $0x128] sm:$0xff]
  %v657 = vld [vmem:[%s7 + $0x130] sm:$0xff]
  %v658 = vld [vmem:[%s7 + $0x138] sm:$0xff]
  %v659 = vld [vmem:[%s7 + $0x140] sm:$0xff]
  %v660 = vld [vmem:[%s7 + $0x148] sm:$0xff]
  %v661 = vld [vmem:[%s7 + $0x150] sm:$0xff]
  %v662 = vld [vmem:[%s7 + $0x158] sm:$0xff]
  %v663 = vld [vmem:[%s7 + $0x160] sm:$0xff]
  %v664 = vld [vmem:[%s7 + $0x168] sm:$0xff]
  %v665 = vld [vmem:[%s7 + $0x170] sm:$0xff]
  %v666 = vld [vmem:[%s7 + $0x178] sm:$0xff]
  %v667 = vld [vmem:[%s7 + $0x180] sm:$0xff]
  %v668 = vld [vmem:[%s7 + $0x188] sm:$0xff]
  %v669 = vld [vmem:[%s7 + $0x190] sm:$0xff]
  %v670 = vld [vmem:[%s7 + $0x198] sm:$0xff]
  %v671 = vld [vmem:[%s7 + $0x1a0] sm:$0xff]
  %v672 = vld [vmem:[%s7 + $0x1a8] sm:$0xff]
  %v673 = vld [vmem:[%s7 + $0x1b0] sm:$0xff]
  %v674 = vld [vmem:[%s7 + $0x1b8] sm:$0xff]
  %v675 = vld [vmem:[%s7 + $0x1c0] sm:$0xff]
  %v676 = vld [vmem:[%s7 + $0x1c8] sm:$0xff]
  %v677 = vld [vmem:[%s7 + $0x1d0] sm:$0xff]
  %v678 = vld [vmem:[%s7 + $0x1d8] sm:$0xff]
  %v679 = vld [vmem:[%s7 + $0x1e0] sm:$0xff]
  %v680 = vld [vmem:[%s7 + $0x1e8] sm:$0xff]
  %v681 = vld [vmem:[%s7 + $0x1f0] sm:$0xff]
  %v682 = vld [vmem:[%s7 + $0x1f8] sm:$0xff]
  %v747 = vunpack.c.l.b16 %v619
  %v748 = vunpack.c.h.b16 %v619
  %v749 = vunpack.c.l.b16 %v620
  %v750 = vunpack.c.h.b16 %v620
  %v751 = vunpack.c.l.b16 %v621
  %v752 = vunpack.c.h.b16 %v621
  %v753 = vunpack.c.l.b16 %v622
  %v754 = vunpack.c.h.b16 %v622
  %v755 = vunpack.c.l.b16 %v623
  %v756 = vunpack.c.h.b16 %v623
  %v757 = vunpack.c.l.b16 %v624
  %v758 = vunpack.c.h.b16 %v624
  %v759 = vunpack.c.l.b16 %v625
  %v760 = vunpack.c.h.b16 %v625
  %v761 = vunpack.c.l.b16 %v626
  %v762 = vunpack.c.h.b16 %v626
  %v763 = vunpack.c.l.b16 %v627
  %v764 = vunpack.c.h.b16 %v627
  %v765 = vunpack.c.l.b16 %v628
  %v766 = vunpack.c.h.b16 %v628
  %v767 = vunpack.c.l.b16 %v629
  %v768 = vunpack.c.h.b16 %v629
  %v769 = vunpack.c.l.b16 %v630
  %v770 = vunpack.c.h.b16 %v630
  %v771 = vunpack.c.l.b16 %v631
  %v772 = vunpack.c.h.b16 %v631
  %v773 = vunpack.c.l.b16 %v632
  %v774 = vunpack.c.h.b16 %v632
  %v775 = vunpack.c.l.b16 %v633
  %v776 = vunpack.c.h.b16 %v633
  %v777 = vunpack.c.l.b16 %v634
  %v778 = vunpack.c.h.b16 %v634
  %v779 = vunpack.c.l.b16 %v635
  %v780 = vunpack.c.h.b16 %v635
  %v781 = vunpack.c.l.b16 %v636
  %v782 = vunpack.c.h.b16 %v636
  %v783 = vunpack.c.l.b16 %v637
  %v784 = vunpack.c.h.b16 %v637
  %v785 = vunpack.c.l.b16 %v638
  %v786 = vunpack.c.h.b16 %v638
  %v787 = vunpack.c.l.b16 %v639
  %v788 = vunpack.c.h.b16 %v639
  %v789 = vunpack.c.l.b16 %v640
  %v790 = vunpack.c.h.b16 %v640
  %v791 = vunpack.c.l.b16 %v641
  %v792 = vunpack.c.h.b16 %v641
  %v793 = vunpack.c.l.b16 %v642
  %v794 = vunpack.c.h.b16 %v642
  %v795 = vunpack.c.l.b16 %v643
  %v796 = vunpack.c.h.b16 %v643
  %v797 = vunpack.c.l.b16 %v644
  %v798 = vunpack.c.h.b16 %v644
  %v799 = vunpack.c.l.b16 %v645
  %v800 = vunpack.c.h.b16 %v645
  %v801 = vunpack.c.l.b16 %v646
  %v802 = vunpack.c.h.b16 %v646
  %v803 = vunpack.c.l.b16 %v647
  %v804 = vunpack.c.h.b16 %v647
  %v805 = vunpack.c.l.b16 %v648
  %v806 = vunpack.c.h.b16 %v648
  %v807 = vunpack.c.l.b16 %v649
  %v808 = vunpack.c.h.b16 %v649
  %v809 = vunpack.c.l.b16 %v650
  %v810 = vunpack.c.h.b16 %v650
  %v811 = vunpack.c.l.b16 %v651
  %v812 = vunpack.c.h.b16 %v651
  %v813 = vunpack.c.l.b16 %v652
  %v814 = vunpack.c.h.b16 %v652
  %v815 = vunpack.c.l.b16 %v653
  %v816 = vunpack.c.h.b16 %v653
  %v817 = vunpack.c.l.b16 %v654
  %v818 = vunpack.c.h.b16 %v654
  %v819 = vunpack.c.l.b16 %v655
  %v820 = vunpack.c.h.b16 %v655
  %v821 = vunpack.c.l.b16 %v656
  %v822 = vunpack.c.h.b16 %v656
  %v823 = vunpack.c.l.b16 %v657
  %v824 = vunpack.c.h.b16 %v657
  %v825 = vunpack.c.l.b16 %v658
  %v826 = vunpack.c.h.b16 %v658
  %v827 = vunpack.c.l.b16 %v659
  %v828 = vunpack.c.h.b16 %v659
  %v829 = vunpack.c.l.b16 %v660
  %v830 = vunpack.c.h.b16 %v660
  %v831 = vunpack.c.l.b16 %v661
  %v832 = vunpack.c.h.b16 %v661
  %v833 = vunpack.c.l.b16 %v662
  %v834 = vunpack.c.h.b16 %v662
  %v835 = vunpack.c.l.b16 %v663
  %v836 = vunpack.c.h.b16 %v663
  %v837 = vunpack.c.l.b16 %v664
  %v838 = vunpack.c.h.b16 %v664
  %v839 = vunpack.c.l.b16 %v665
  %v840 = vunpack.c.h.b16 %v665
  %v841 = vunpack.c.l.b16 %v666
  %v842 = vunpack.c.h.b16 %v666
  %v843 = vunpack.c.l.b16 %v667
  %v844 = vunpack.c.h.b16 %v667
  %v845 = vunpack.c.l.b16 %v668
  %v846 = vunpack.c.h.b16 %v668
  %v847 = vunpack.c.l.b16 %v669
  %v848 = vunpack.c.h.b16 %v669
  %v849 = vunpack.c.l.b16 %v670
  %v850 = vunpack.c.h.b16 %v670
  %v851 = vunpack.c.l.b16 %v671
  %v852 = vunpack.c.h.b16 %v671
  %v853 = vunpack.c.l.b16 %v672
  %v854 = vunpack.c.h.b16 %v672
  %v855 = vunpack.c.l.b16 %v673
  %v856 = vunpack.c.h.b16 %v673
  %v857 = vunpack.c.l.b16 %v674
  %v858 = vunpack.c.h.b16 %v674
  %v859 = vunpack.c.l.b16 %v675
  %v860 = vunpack.c.h.b16 %v675
  %v861 = vunpack.c.l.b16 %v676
  %v862 = vunpack.c.h.b16 %v676
  %v863 = vunpack.c.l.b16 %v677
  %v864 = vunpack.c.h.b16 %v677
  %v865 = vunpack.c.l.b16 %v678
  %v866 = vunpack.c.h.b16 %v678
  %v867 = vunpack.c.l.b16 %v679
  %v868 = vunpack.c.h.b16 %v679
  %v869 = vunpack.c.l.b16 %v680
  %v870 = vunpack.c.h.b16 %v680
  %v871 = vunpack.c.l.b16 %v681
  %v872 = vunpack.c.h.b16 %v681
  %v873 = vunpack.c.l.b16 %v682
  %v874 = vunpack.c.h.b16 %v682
  %v875 = vpack.c.b16 %v751, %v747
  %v876 = vpack.c.b16 %v752, %v748
  %v877 = vpack.c.b16 %v753, %v749
  %v878 = vpack.c.b16 %v754, %v750
  %v879 = vpack.c.b16 %v759, %v755
  %v880 = vpack.c.b16 %v760, %v756
  %v881 = vpack.c.b16 %v761, %v757
  %v882 = vpack.c.b16 %v762, %v758
  %v883 = vpack.c.b16 %v767, %v763
  %v884 = vpack.c.b16 %v768, %v764
  %v885 = vpack.c.b16 %v769, %v765
  %v886 = vpack.c.b16 %v770, %v766
  %v887 = vpack.c.b16 %v775, %v771
  %v888 = vpack.c.b16 %v776, %v772
  %v889 = vpack.c.b16 %v777, %v773
  %v890 = vpack.c.b16 %v778, %v774
  %v891 = vpack.c.b16 %v783, %v779
  %v892 = vpack.c.b16 %v784, %v780
  %v893 = vpack.c.b16 %v785, %v781
  %v894 = vpack.c.b16 %v786, %v782
  %v895 = vpack.c.b16 %v791, %v787
  %v896 = vpack.c.b16 %v792, %v788
  %v897 = vpack.c.b16 %v793, %v789
  %v898 = vpack.c.b16 %v794, %v790
  %v899 = vpack.c.b16 %v799, %v795
  %v900 = vpack.c.b16 %v800, %v796
  %v901 = vpack.c.b16 %v801, %v797
  %v902 = vpack.c.b16 %v802, %v798
  %v903 = vpack.c.b16 %v807, %v803
  %v904 = vpack.c.b16 %v808, %v804
  %v905 = vpack.c.b16 %v809, %v805
  %v906 = vpack.c.b16 %v810, %v806
  %v907 = vpack.c.b16 %v815, %v811
  %v908 = vpack.c.b16 %v816, %v812
  %v909 = vpack.c.b16 %v817, %v813
  %v910 = vpack.c.b16 %v818, %v814
  %v911 = vpack.c.b16 %v823, %v819
  %v912 = vpack.c.b16 %v824, %v820
  %v913 = vpack.c.b16 %v825, %v821
  %v914 = vpack.c.b16 %v826, %v822
  %v915 = vpack.c.b16 %v831, %v827
  %v916 = vpack.c.b16 %v832, %v828
  %v917 = vpack.c.b16 %v833, %v829
  %v918 = vpack.c.b16 %v834, %v830
  %v919 = vpack.c.b16 %v839, %v835
  %v920 = vpack.c.b16 %v840, %v836
  %v921 = vpack.c.b16 %v841, %v837
  %v922 = vpack.c.b16 %v842, %v838
  %v923 = vpack.c.b16 %v847, %v843
  %v924 = vpack.c.b16 %v848, %v844
  %v925 = vpack.c.b16 %v849, %v845
  %v926 = vpack.c.b16 %v850, %v846
  %v927 = vpack.c.b16 %v855, %v851
  %v928 = vpack.c.b16 %v856, %v852
  %v929 = vpack.c.b16 %v857, %v853
  %v930 = vpack.c.b16 %v858, %v854
  %v931 = vpack.c.b16 %v863, %v859
  %v932 = vpack.c.b16 %v864, %v860
  %v933 = vpack.c.b16 %v865, %v861
  %v934 = vpack.c.b16 %v866, %v862
  %v935 = vpack.c.b16 %v871, %v867
  %v936 = vpack.c.b16 %v872, %v868
  %v937 = vpack.c.b16 %v873, %v869
  %v938 = vpack.c.b16 %v874, %v870
  %1003 = vmatpush.bf16.msra.mxu0 %v903
  %1004 = vmatpush.bf16.msra.mxu0 %v899
  %1005 = vmatpush.bf16.msra.mxu0 %v895
  %1006 = vmatpush.bf16.msra.mxu0 %v891
  %1007 = vmatpush.bf16.msra.mxu0 %v887
  %1008 = vmatpush.bf16.msra.mxu0 %v883
  %1009 = vmatpush.bf16.msra.mxu0 %v879
  %1010 = vmatpush.bf16.msra.mxu0 %v875
  %1011 = vmatmul.bf16.gmra.mxu0 %v459
  %v1012 = vpop.f32.mrf.mxu0
  %v1013 = vadd.f32 0.0, %v1012
  %v1014 = vpop.f32.mrf.mxu0
  %1015 = vdwg.mxu0
  %1016 = vmatpush.bf16.msra.mxu0 %v935
  %1017 = vmatpush.bf16.msra.mxu0 %v931
  %1018 = vmatpush.bf16.msra.mxu0 %v927
  %1019 = vmatpush.bf16.msra.mxu0 %v923
  %1020 = vmatpush.bf16.msra.mxu0 %v919
  %1021 = vmatpush.bf16.msra.mxu0 %v915
  %1022 = vmatpush.bf16.msra.mxu0 %v911
  %1023 = vmatpush.bf16.msra.mxu0 %v907
  %1024 = vmatmul.bf16.gmra.mxu0 %v460
  %v1025 = vpop.f32.mrf.mxu0
  %v1026 = vadd.f32 %v1013, %v1025
  %v1027 = vpop.f32.mrf.mxu0
  %1028 = vdwg.mxu0
  %1029 = vmatpush.bf16.msra.mxu0 %v904
  %1030 = vmatpush.bf16.msra.mxu0 %v900
  %1031 = vmatpush.bf16.msra.mxu0 %v896
  %1032 = vmatpush.bf16.msra.mxu0 %v892
  %1033 = vmatpush.bf16.msra.mxu0 %v888
  %1034 = vmatpush.bf16.msra.mxu0 %v884
  %1035 = vmatpush.bf16.msra.mxu0 %v880
  %1036 = vmatpush.bf16.msra.mxu0 %v876
  %1037 = vmatmul.bf16.gmra.mxu0 %v459
  %v1038 = vpop.f32.mrf.mxu0
  %v1039 = vadd.f32 0.0, %v1038
  %v1040 = vpop.f32.mrf.mxu0
  %1041 = vdwg.mxu0
  %1042 = vmatpush.bf16.msra.mxu0 %v936
  %1043 = vmatpush.bf16.msra.mxu0 %v932
  %1044 = vmatpush.bf16.msra.mxu0 %v928
  %1045 = vmatpush.bf16.msra.mxu0 %v924
  %1046 = vmatpush.bf16.msra.mxu0 %v920
  %1047 = vmatpush.bf16.msra.mxu0 %v916
  %1048 = vmatpush.bf16.msra.mxu0 %v912
  %1049 = vmatpush.bf16.msra.mxu0 %v908
  %1050 = vmatmul.bf16.gmra.mxu0 %v460
  %v1051 = vpop.f32.mrf.mxu0
  %v1052 = vadd.f32 %v1039, %v1051
  %v1053 = vpop.f32.mrf.mxu0
  %1054 = vdwg.mxu0
  %1055 = vmatpush.bf16.msra.mxu0 %v905
  %1056 = vmatpush.bf16.msra.mxu0 %v901
  %1057 = vmatpush.bf16.msra.mxu0 %v897
  %1058 = vmatpush.bf16.msra.mxu0 %v893
  %1059 = vmatpush.bf16.msra.mxu0 %v889
  %1060 = vmatpush.bf16.msra.mxu0 %v885
  %1061 = vmatpush.bf16.msra.mxu0 %v881
  %1062 = vmatpush.bf16.msra.mxu0 %v877
  %1063 = vmatmul.bf16.gmra.mxu0 %v459
  %v1064 = vpop.f32.mrf.mxu0
  %v1065 = vadd.f32 0.0, %v1064
  %v1066 = vpop.f32.mrf.mxu0
  %1067 = vdwg.mxu0
  %1068 = vmatpush.bf16.msra.mxu0 %v937
  %1069 = vmatpush.bf16.msra.mxu0 %v933
  %1070 = vmatpush.bf16.msra.mxu0 %v929
  %1071 = vmatpush.bf16.msra.mxu0 %v925
  %1072 = vmatpush.bf16.msra.mxu0 %v921
  %1073 = vmatpush.bf16.msra.mxu0 %v917
  %1074 = vmatpush.bf16.msra.mxu0 %v913
  %1075 = vmatpush.bf16.msra.mxu0 %v909
  %1076 = vmatmul.bf16.gmra.mxu0 %v460
  %v1077 = vpop.f32.mrf.mxu0
  %v1078 = vadd.f32 %v1065, %v1077
  %v1079 = vpop.f32.mrf.mxu0
  %1080 = vdwg.mxu0
  %1081 = vmatpush.bf16.msra.mxu0 %v906
  %1082 = vmatpush.bf16.msra.mxu0 %v902
  %1083 = vmatpush.bf16.msra.mxu0 %v898
  %1084 = vmatpush.bf16.msra.mxu0 %v894
  %1085 = vmatpush.bf16.msra.mxu0 %v890
  %1086 = vmatpush.bf16.msra.mxu0 %v886
  %1087 = vmatpush.bf16.msra.mxu0 %v882
  %1088 = vmatpush.bf16.msra.mxu0 %v878
  %1089 = vmatmul.bf16.gmra.mxu0 %v459
  %v1090 = vpop.f32.mrf.mxu0
  %v1091 = vadd.f32 0.0, %v1090
  %v1092 = vpop.f32.mrf.mxu0
  %1093 = vdwg.mxu0
  %1094 = vmatpush.bf16.msra.mxu0 %v938
  %1095 = vmatpush.bf16.msra.mxu0 %v934
  %1096 = vmatpush.bf16.msra.mxu0 %v930
  %1097 = vmatpush.bf16.msra.mxu0 %v926
  %1098 = vmatpush.bf16.msra.mxu0 %v922
  %1099 = vmatpush.bf16.msra.mxu0 %v918
  %1100 = vmatpush.bf16.msra.mxu0 %v914
  %1101 = vmatpush.bf16.msra.mxu0 %v910
  %1102 = vmatmul.bf16.gmra.mxu0 %v460
  %v1103 = vpop.f32.mrf.mxu0
  %v1104 = vadd.f32 %v1091, %v1103
  %v1105 = vpop.f32.mrf.mxu0
  %1106 = vdwg.mxu0
  %v1107 = vadd.f32 %v153, %v1026
  %v1108 = vadd.f32 %v166, %v1052
  %v1109 = vadd.f32 %v179, %v1078
  %v1110 = vadd.f32 %v192, %v1104
  %v1111 = vld [vmem:[%s8] sm:$0xf]
  %v1113 = vperm.slane %v1111, 0
  %v1114 = vperm.slane %v1111, 1
  %v1115 = vperm.slane %v1111, 2
  %v1116 = vperm.slane %v1111, 3
  %v1121 = vadd.f32 %v1107, %v1113
  %v1122 = vadd.f32 %v1108, %v1114
  %v1123 = vadd.f32 %v1109, %v1115
  %v1124 = vadd.f32 %v1110, %v1116
  %v1125 = vmax.f32 %v1121, 0.0
  %v1126 = vmax.f32 %v1122, 0.0
  %v1127 = vmax.f32 %v1123, 0.0
  %v1128 = vmax.f32 %v1124, 0.0
  %v1129 = vpack.c.bf16 %v1125, %v1125
  %v1130 = vpack.c.bf16 %v1126, %v1126
  %v1131 = vpack.c.bf16 %v1127, %v1127
  %v1132 = vpack.c.bf16 %v1128, %v1128
  %v1133 = vld [vmem:[%s9] sm:$0xf]
  %v1134 = vld [vmem:[%s9 + $0x4] sm:$0xf]
  %v1135 = vld [vmem:[%s9 + $0x8] sm:$0xf]
  %v1136 = vld [vmem:[%s9 + $0xc] sm:$0xf]
  %v1137 = vld [vmem:[%s9 + $0x10] sm:$0xf]
  %v1138 = vld [vmem:[%s9 + $0x14] sm:$0xf]
  %v1139 = vld [vmem:[%s9 + $0x18] sm:$0xf]
  %v1140 = vld [vmem:[%s9 + $0x1c] sm:$0xf]
  %v1141 = vld [vmem:[%s9 + $0x20] sm:$0xf]
  %v1142 = vld [vmem:[%s9 + $0x24] sm:$0xf]
  %v1143 = vld [vmem:[%s9 + $0x28] sm:$0xf]
  %v1144 = vld [vmem:[%s9 + $0x2c] sm:$0xf]
  %v1145 = vld [vmem:[%s9 + $0x30] sm:$0xf]
  %v1146 = vld [vmem:[%s9 + $0x34] sm:$0xf]
  %v1147 = vld [vmem:[%s9 + $0x38] sm:$0xf]
  %v1148 = vld [vmem:[%s9 + $0x3c] sm:$0xf]
  %v1149 = vld [vmem:[%s9 + $0x40] sm:$0xf]
  %v1150 = vld [vmem:[%s9 + $0x44] sm:$0xf]
  %v1151 = vld [vmem:[%s9 + $0x48] sm:$0xf]
  %v1152 = vld [vmem:[%s9 + $0x4c] sm:$0xf]
  %v1153 = vld [vmem:[%s9 + $0x50] sm:$0xf]
  %v1154 = vld [vmem:[%s9 + $0x54] sm:$0xf]
  %v1155 = vld [vmem:[%s9 + $0x58] sm:$0xf]
  %v1156 = vld [vmem:[%s9 + $0x5c] sm:$0xf]
  %v1157 = vld [vmem:[%s9 + $0x60] sm:$0xf]
  %v1158 = vld [vmem:[%s9 + $0x64] sm:$0xf]
  %v1159 = vld [vmem:[%s9 + $0x68] sm:$0xf]
  %v1160 = vld [vmem:[%s9 + $0x6c] sm:$0xf]
  %v1161 = vld [vmem:[%s9 + $0x70] sm:$0xf]
  %v1162 = vld [vmem:[%s9 + $0x74] sm:$0xf]
  %v1163 = vld [vmem:[%s9 + $0x78] sm:$0xf]
  %v1164 = vld [vmem:[%s9 + $0x7c] sm:$0xf]
  %v1165 = vld [vmem:[%s9 + $0x80] sm:$0xf]
  %v1166 = vld [vmem:[%s9 + $0x84] sm:$0xf]
  %v1167 = vld [vmem:[%s9 + $0x88] sm:$0xf]
  %v1168 = vld [vmem:[%s9 + $0x8c] sm:$0xf]
  %v1169 = vld [vmem:[%s9 + $0x90] sm:$0xf]
  %v1170 = vld [vmem:[%s9 + $0x94] sm:$0xf]
  %v1171 = vld [vmem:[%s9 + $0x98] sm:$0xf]
  %v1172 = vld [vmem:[%s9 + $0x9c] sm:$0xf]
  %v1173 = vld [vmem:[%s9 + $0xa0] sm:$0xf]
  %v1174 = vld [vmem:[%s9 + $0xa4] sm:$0xf]
  %v1175 = vld [vmem:[%s9 + $0xa8] sm:$0xf]
  %v1176 = vld [vmem:[%s9 + $0xac] sm:$0xf]
  %v1177 = vld [vmem:[%s9 + $0xb0] sm:$0xf]
  %v1178 = vld [vmem:[%s9 + $0xb4] sm:$0xf]
  %v1179 = vld [vmem:[%s9 + $0xb8] sm:$0xf]
  %v1180 = vld [vmem:[%s9 + $0xbc] sm:$0xf]
  %v1181 = vld [vmem:[%s9 + $0xc0] sm:$0xf]
  %v1182 = vld [vmem:[%s9 + $0xc4] sm:$0xf]
  %v1183 = vld [vmem:[%s9 + $0xc8] sm:$0xf]
  %v1184 = vld [vmem:[%s9 + $0xcc] sm:$0xf]
  %v1185 = vld [vmem:[%s9 + $0xd0] sm:$0xf]
  %v1186 = vld [vmem:[%s9 + $0xd4] sm:$0xf]
  %v1187 = vld [vmem:[%s9 + $0xd8] sm:$0xf]
  %v1188 = vld [vmem:[%s9 + $0xdc] sm:$0xf]
  %v1189 = vld [vmem:[%s9 + $0xe0] sm:$0xf]
  %v1190 = vld [vmem:[%s9 + $0xe4] sm:$0xf]
  %v1191 = vld [vmem:[%s9 + $0xe8] sm:$0xf]
  %v1192 = vld [vmem:[%s9 + $0xec] sm:$0xf]
  %v1193 = vld [vmem:[%s9 + $0xf0] sm:$0xf]
  %v1194 = vld [vmem:[%s9 + $0xf4] sm:$0xf]
  %v1195 = vld [vmem:[%s9 + $0xf8] sm:$0xf]
  %v1196 = vld [vmem:[%s9 + $0xfc] sm:$0xf]
  %v1197 = vld [vmem:[%s10] sm:$0x1]
  %v1199 = vperm.slane %v1197, 0
  %v1265 = vunpack.c.l.b16 %v1133
  %v1266 = vunpack.c.l.b16 %v1134
  %v1267 = vunpack.c.l.b16 %v1135
  %v1268 = vunpack.c.l.b16 %v1136
  %v1269 = vunpack.c.l.b16 %v1137
  %v1270 = vunpack.c.l.b16 %v1138
  %v1271 = vunpack.c.l.b16 %v1139
  %v1272 = vunpack.c.l.b16 %v1140
  %v1273 = vunpack.c.l.b16 %v1141
  %v1274 = vunpack.c.l.b16 %v1142
  %v1275 = vunpack.c.l.b16 %v1143
  %v1276 = vunpack.c.l.b16 %v1144
  %v1277 = vunpack.c.l.b16 %v1145
  %v1278 = vunpack.c.l.b16 %v1146
  %v1279 = vunpack.c.l.b16 %v1147
  %v1280 = vunpack.c.l.b16 %v1148
  %v1281 = vunpack.c.l.b16 %v1149
  %v1282 = vunpack.c.l.b16 %v1150
  %v1283 = vunpack.c.l.b16 %v1151
  %v1284 = vunpack.c.l.b16 %v1152
  %v1285 = vunpack.c.l.b16 %v1153
  %v1286 = vunpack.c.l.b16 %v1154
  %v1287 = vunpack.c.l.b16 %v1155
  %v1288 = vunpack.c.l.b16 %v1156
  %v1289 = vunpack.c.l.b16 %v1157
  %v1290 = vunpack.c.l.b16 %v1158
  %v1291 = vunpack.c.l.b16 %v1159
  %v1292 = vunpack.c.l.b16 %v1160
  %v1293 = vunpack.c.l.b16 %v1161
  %v1294 = vunpack.c.l.b16 %v1162
  %v1295 = vunpack.c.l.b16 %v1163
  %v1296 = vunpack.c.l.b16 %v1164
  %v1297 = vunpack.c.l.b16 %v1165
  %v1298 = vunpack.c.l.b16 %v1166
  %v1299 = vunpack.c.l.b16 %v1167
  %v1300 = vunpack.c.l.b16 %v1168
  %v1301 = vunpack.c.l.b16 %v1169
  %v1302 = vunpack.c.l.b16 %v1170
  %v1303 = vunpack.c.l.b16 %v1171
  %v1304 = vunpack.c.l.b16 %v1172
  %v1305 = vunpack.c.l.b16 %v1173
  %v1306 = vunpack.c.l.b16 %v1174
  %v1307 = vunpack.c.l.b16 %v1175
  %v1308 = vunpack.c.l.b16 %v1176
  %v1309 = vunpack.c.l.b16 %v1177
  %v1310 = vunpack.c.l.b16 %v1178
  %v1311 = vunpack.c.l.b16 %v1179
  %v1312 = vunpack.c.l.b16 %v1180
  %v1313 = vunpack.c.l.b16 %v1181
  %v1314 = vunpack.c.l.b16 %v1182
  %v1315 = vunpack.c.l.b16 %v1183
  %v1316 = vunpack.c.l.b16 %v1184
  %v1317 = vunpack.c.l.b16 %v1185
  %v1318 = vunpack.c.l.b16 %v1186
  %v1319 = vunpack.c.l.b16 %v1187
  %v1320 = vunpack.c.l.b16 %v1188
  %v1321 = vunpack.c.l.b16 %v1189
  %v1322 = vunpack.c.l.b16 %v1190
  %v1323 = vunpack.c.l.b16 %v1191
  %v1324 = vunpack.c.l.b16 %v1192
  %v1325 = vunpack.c.l.b16 %v1193
  %v1326 = vunpack.c.l.b16 %v1194
  %v1327 = vunpack.c.l.b16 %v1195
  %v1328 = vunpack.c.l.b16 %v1196
  %v1329 = vpack.c.b16 %v1266, %v1265
  %v1330 = vpack.c.b16 %v1268, %v1267
  %v1331 = vpack.c.b16 %v1270, %v1269
  %v1332 = vpack.c.b16 %v1272, %v1271
  %v1333 = vpack.c.b16 %v1274, %v1273
  %v1334 = vpack.c.b16 %v1276, %v1275
  %v1335 = vpack.c.b16 %v1278, %v1277
  %v1336 = vpack.c.b16 %v1280, %v1279
  %v1337 = vpack.c.b16 %v1282, %v1281
  %v1338 = vpack.c.b16 %v1284, %v1283
  %v1339 = vpack.c.b16 %v1286, %v1285
  %v1340 = vpack.c.b16 %v1288, %v1287
  %v1341 = vpack.c.b16 %v1290, %v1289
  %v1342 = vpack.c.b16 %v1292, %v1291
  %v1343 = vpack.c.b16 %v1294, %v1293
  %v1344 = vpack.c.b16 %v1296, %v1295
  %v1345 = vpack.c.b16 %v1298, %v1297
  %v1346 = vpack.c.b16 %v1300, %v1299
  %v1347 = vpack.c.b16 %v1302, %v1301
  %v1348 = vpack.c.b16 %v1304, %v1303
  %v1349 = vpack.c.b16 %v1306, %v1305
  %v1350 = vpack.c.b16 %v1308, %v1307
  %v1351 = vpack.c.b16 %v1310, %v1309
  %v1352 = vpack.c.b16 %v1312, %v1311
  %v1353 = vpack.c.b16 %v1314, %v1313
  %v1354 = vpack.c.b16 %v1316, %v1315
  %v1355 = vpack.c.b16 %v1318, %v1317
  %v1356 = vpack.c.b16 %v1320, %v1319
  %v1357 = vpack.c.b16 %v1322, %v1321
  %v1358 = vpack.c.b16 %v1324, %v1323
  %v1359 = vpack.c.b16 %v1326, %v1325
  %v1360 = vpack.c.b16 %v1328, %v1327
  %1393 = vmatpush.bf16.msra.mxu0 %v1336
  %1394 = vmatpush.bf16.msra.mxu0 %v1335
  %1395 = vmatpush.bf16.msra.mxu0 %v1334
  %1396 = vmatpush.bf16.msra.mxu0 %v1333
  %1397 = vmatpush.bf16.msra.mxu0 %v1332
  %1398 = vmatpush.bf16.msra.mxu0 %v1331
  %1399 = vmatpush.bf16.msra.mxu0 %v1330
  %1400 = vmatpush.bf16.msra.mxu0 %v1329
  %1401 = vmatmul.bf16.gmra.mxu0 %v1129
  %v1402 = vpop.f32.mrf.mxu0
  %v1403 = vadd.f32 %v1199, %v1402
  %v1404 = vpop.f32.mrf.mxu0
  %1405 = vdwg.mxu0
  %1406 = vmatpush.bf16.msra.mxu0 %v1344
  %1407 = vmatpush.bf16.msra.mxu0 %v1343
  %1408 = vmatpush.bf16.msra.mxu0 %v1342
  %1409 = vmatpush.bf16.msra.mxu0 %v1341
  %1410 = vmatpush.bf16.msra.mxu0 %v1340
  %1411 = vmatpush.bf16.msra.mxu0 %v1339
  %1412 = vmatpush.bf16.msra.mxu0 %v1338
  %1413 = vmatpush.bf16.msra.mxu0 %v1337
  %1414 = vmatmul.bf16.gmra.mxu0 %v1130
  %v1415 = vpop.f32.mrf.mxu0
  %v1416 = vadd.f32 %v1403, %v1415
  %v1417 = vpop.f32.mrf.mxu0
  %1418 = vdwg.mxu0
  %1419 = vmatpush.bf16.msra.mxu0 %v1352
  %1420 = vmatpush.bf16.msra.mxu0 %v1351
  %1421 = vmatpush.bf16.msra.mxu0 %v1350
  %1422 = vmatpush.bf16.msra.mxu0 %v1349
  %1423 = vmatpush.bf16.msra.mxu0 %v1348
  %1424 = vmatpush.bf16.msra.mxu0 %v1347
  %1425 = vmatpush.bf16.msra.mxu0 %v1346
  %1426 = vmatpush.bf16.msra.mxu0 %v1345
  %1427 = vmatmul.bf16.gmra.mxu0 %v1131
  %v1428 = vpop.f32.mrf.mxu0
  %v1429 = vadd.f32 %v1416, %v1428
  %v1430 = vpop.f32.mrf.mxu0
  %1431 = vdwg.mxu0
  %1432 = vmatpush.bf16.msra.mxu0 %v1360
  %1433 = vmatpush.bf16.msra.mxu0 %v1359
  %1434 = vmatpush.bf16.msra.mxu0 %v1358
  %1435 = vmatpush.bf16.msra.mxu0 %v1357
  %1436 = vmatpush.bf16.msra.mxu0 %v1356
  %1437 = vmatpush.bf16.msra.mxu0 %v1355
  %1438 = vmatpush.bf16.msra.mxu0 %v1354
  %1439 = vmatpush.bf16.msra.mxu0 %v1353
  %1440 = vmatmul.bf16.gmra.mxu0 %v1132
  %v1441 = vpop.f32.mrf.mxu0
  %v1442 = vadd.f32 %v1429, %v1441
  %v1443 = vpop.f32.mrf.mxu0
  %1444 = vdwg.mxu0
  %v1445 = vlaneseq
  %v1446 = vand.u32 %v1445, 127
  %vm1447 = vcmp.eq.s32.totalorder %v1446, 32
  %vm1448 = vcmp.eq.s32.totalorder %v1446, 33
  %vm1449 = vmor %vm1447, %vm1448
  %v1450 = vxor.u32 %v1442, 2147483648
  %v1451 = vmul.f32 %v1450, 1.442695
  %v1452 = vpow.pop %v1451
  %v1453 = vadd.f32 %v1452, 1.0
  %v1454 = vrcp.pop %v1453
  %v1455 = vmul.f32 %v1453, %v1454
  %v1456 = vsub.f32 1.0, %v1455
  %v1457 = vmul.f32 %v1454, %v1456
  %v1458 = vadd.f32 %v1454, %v1457
  %vm1459 = vweird.f32 %v1453
  %vm1460 = vweird.f32 %v1454
  %vm1461 = vmor %vm1459, %vm1460
  %v1462 = vsel %vm1461, %v1454, %v1458
  %v1463 = vand.u32 2147483647, %v1453
  %vm1464 = vcmp.eq.f32.partialorder %v1463, 8.507059e+37
  %v1465 = vand.u32 %v1453, 2147483648
  %v1466 = vor.u32 1.1754944e-38, %v1465
  %v1467 = vsel %vm1464, %v1466, %v1462
  %v1468 = vmul.f32 1.0, %v1467
  %v1469 = vsel %vm1449, %v1468, 0.0
  %v1470 = vadd.f32 %v616, %v1469
  %1471 = vst [vmem:[%s11] sm:$0xff] %v1470
  // Predicated region
  $region46: #{introspection_forward.1} parent=0 // pred_check
    _
  $region47: #{introspection_forward.1} parent=0 // pred_check_branch
    %1473 = sbr.rel (0) target = $region49
  $region48: #{introspection_forward.1} parent=0 // pred_region
    _
  $region49: #{introspection_forward.1} parent=0 // pred_fallthru
    _
  // Predicated region
  $region50: #{introspection_forward.1} parent=0 // pred_check
    _
  $region51: #{introspection_forward.1} parent=0 // pred_check_branch
    %1475 = sbr.rel (0) target = $region53
  $region52: #{introspection_forward.1} parent=0 // pred_region
    _
  $region53: #{introspection_forward.1} parent=0 // pred_fallthru
    _

</llo_original>
